<compile_context>
chip_gen: v5e
topology: v5e:2x2
jax: 0.10.0
libtpu: 0.0.40
codegen_flags: <defaults>
</compile_context>

<pallas_src>
import functools

import jax
import jax.numpy as jnp
from jax.experimental import pallas as pl
from jax.experimental.pallas import tpu as pltpu


def channel_attention_kernel(x_ref, w1t_ref, b1_ref, w2t_ref, b2_ref, o_ref,
                             sum_acc, max_acc, *, hw_total, hw_tile):
    k = pl.program_id(1)
    nk = pl.num_programs(1)

    @pl.when(k == 0)
    def _init():
        sum_acc[...] = jnp.zeros_like(sum_acc)
        max_acc[...] = jnp.full_like(max_acc, -jnp.inf)

    x = x_ref[...].astype(jnp.float32)                    # (BT, C, hw_tile)

    if hw_total % hw_tile != 0:
        # Last spatial tile is partial: mask padded lanes out of sum and max.
        lane = jax.lax.broadcasted_iota(jnp.int32, x.shape, 2)
        valid = (k * hw_tile + lane) < hw_total
        x_sum = jnp.where(valid, x, 0.0)
        x_max = jnp.where(valid, x, -jnp.inf)
    else:
        x_sum = x
        x_max = x

    sum_acc[...] += jnp.sum(x_sum, axis=-1)               # (BT, C)
    max_acc[...] = jnp.maximum(max_acc[...], jnp.max(x_max, axis=-1))

    @pl.when(k == nk - 1)
    def _finalize():
        avg = sum_acc[...] * (1.0 / hw_total)              # divide by FULL H*W
        mx = max_acc[...]
        bt = avg.shape[0]

        # Fused MLP: one matmul for both pooled paths.
        pooled = jnp.concatenate([avg, mx], axis=0)        # (2*BT, C)
        h = jnp.dot(pooled, w1t_ref[...],
                    preferred_element_type=jnp.float32) + b1_ref[...]
        h = jnp.maximum(h, 0.0)                            # ReLU, (2*BT, Cr)

        # Second layer is linear: fc2(a) + fc2(b) = (a + b) @ W2^T + 2*b2.
        h_sum = h[:bt, :] + h[bt:, :]                      # (BT, Cr)
        out = (jnp.dot(h_sum, w2t_ref[...],
                       preferred_element_type=jnp.float32)
               + 2.0 * b2_ref[...])                        # (BT, C)

        o_ref[...] = jax.nn.sigmoid(out)[:, None, :].astype(o_ref.dtype)


def channel_attention(x, w1, b1, w2, b2, *, bt=None, hw_tile=None):
    """x: (B, C, H, W); w1: (C//16, C, 1, 1); b1: (C//16,);
    w2: (C, C//16, 1, 1); b2: (C,).  Returns sigmoid attention of shape (B, C, 1, 1)."""
    B, C, H, W = x.shape
    Cr = w1.shape[0]
    HW = H * W
    itemsize = jnp.dtype(x.dtype).itemsize

    # --- tile sizing -------------------------------------------------------
    if bt is None:
        bt = min(B, 8)
    bt = max(1, min(bt, B))

    if hw_tile is None:
        budget = 24 * 1024 * 1024                          # double-buffered x-block budget
        max_lanes = max(128, budget // (2 * bt * C * itemsize))
        if HW <= max_lanes:
            hw_tile = HW
        else:
            hw_tile = max(128, min(2048, (max_lanes // 128) * 128))
    assert hw_tile == HW or hw_tile % 128 == 0, "hw_tile must be 128-aligned or full"

    nb = pl.cdiv(B, bt)
    nk = pl.cdiv(HW, hw_tile)

    # --- layout plumbing ---------------------------------------------------
    x_flat = x.reshape(B, C, HW)
    w1t = w1.reshape(Cr, C).T                              # (C, Cr)
    w2t = w2.reshape(C, Cr).T                              # (Cr, C)
    b1r = b1.reshape(1, Cr)
    b2r = b2.reshape(1, C)

    kernel = functools.partial(channel_attention_kernel,
                               hw_total=HW, hw_tile=hw_tile)

    weight_bytes = (C * Cr + Cr * C + Cr + C) * 4
    cost = pl.CostEstimate(
        flops=2 * B * C * HW + 8 * B * C * Cr,
        transcendentals=B * C,
        bytes_accessed=B * C * HW * itemsize + B * C * itemsize + weight_bytes,
    )

    vmem_limit = (2 * bt * C * hw_tile * itemsize          # double-buffered x block
                  + 8 * bt * C * 4                         # scratch + resident output
                  + 4 * weight_bytes                       # buffered weights/biases
                  + (8 << 20))                             # headroom
    vmem_limit = int(min(max(vmem_limit, 32 << 20), 64 << 20))

    out = pl.pallas_call(
        kernel,
        out_shape=jax.ShapeDtypeStruct((B, 1, C), x.dtype),
        grid_spec=pltpu.PrefetchScalarGridSpec(
            num_scalar_prefetch=0,
            grid=(nb, nk),
            in_specs=[
                pl.BlockSpec((bt, C, hw_tile), lambda b, k: (b, 0, k)),  # x tiles
                pl.BlockSpec((C, Cr), lambda b, k: (0, 0)),              # W1^T
                pl.BlockSpec((1, Cr), lambda b, k: (0, 0)),              # b1
                pl.BlockSpec((Cr, C), lambda b, k: (0, 0)),              # W2^T
                pl.BlockSpec((1, C), lambda b, k: (0, 0)),               # b2
            ],
            out_specs=pl.BlockSpec((bt, 1, C), lambda b, k: (b, 0, 0)),  # resident over k
            scratch_shapes=[
                pltpu.VMEM((bt, C), jnp.float32),   # running sum
                pltpu.VMEM((bt, C), jnp.float32),   # running max
            ],
        ),
        compiler_params=pltpu.CompilerParams(
            dimension_semantics=("parallel", "arbitrary"),
            vmem_limit_bytes=vmem_limit,
        ),
        cost_estimate=cost,
    )(x_flat, w1t, b1r, w2t, b2r)

    # (B, 1, C) -> (B, C, 1, 1) to match nn.Conv2d output shape convention.
    return out.reshape(B, C, 1, 1)


def channel_attention_ref(x, w1, b1, w2, b2):
    """Pure-JAX reference mirroring the PyTorch forward."""
    B, C, H, W = x.shape
    Cr = w1.shape[0]
    avg = jnp.mean(x, axis=(2, 3))                # (B, C)
    mx = jnp.max(x, axis=(2, 3))                  # (B, C)
    w1m = w1.reshape(Cr, C)
    w2m = w2.reshape(C, Cr)

    def mlp(p):
        h = jnp.maximum(p @ w1m.T + b1, 0.0)
        return h @ w2m.T + b2

    out = jax.nn.sigmoid(mlp(avg) + mlp(mx))
    return out.reshape(B, C, 1, 1)


if __name__ == "__main__":
    def make_inputs(key, B, C, H, W):
        Cr = C // 16
        kx, k1, k2, k3, k4 = jax.random.split(key, 5)
        x = jax.random.normal(kx, (B, C, H, W), dtype=jnp.float32)
        w1 = jax.random.normal(k1, (Cr, C, 1, 1), dtype=jnp.float32) * 0.1
        b1 = jax.random.normal(k2, (Cr,), dtype=jnp.float32) * 0.1
        w2 = jax.random.normal(k3, (C, Cr, 1, 1), dtype=jnp.float32) * 0.1
        b2 = jax.random.normal(k4, (C,), dtype=jnp.float32) * 0.1
        return x, w1, b1, w2, b2

    # Test 1: small input, single spatial tile (channels must be >= 16).
    B, C, H, W = 2, 64, 16, 16
    x, w1, b1, w2, b2 = make_inputs(jax.random.PRNGKey(0), B, C, H, W)
    out = jax.block_until_ready(channel_attention(x, w1, b1, w2, b2))
    ref = channel_attention_ref(x, w1, b1, w2, b2)
    assert out.shape == (B, C, 1, 1)
    assert jnp.allclose(out, ref, atol=1e-5, rtol=1e-5)

    # Test 2: force spatial tiling with a partial last tile (HW=576, tile=128)
    # and a partial batch block (B=3, bt=2) to exercise the masking/accumulator path.
    B, C, H, W = 3, 64, 24, 24
    x, w1, b1, w2, b2 = make_inputs(jax.random.PRNGKey(1), B, C, H, W)
    out = jax.block_until_ready(
        channel_attention(x, w1, b1, w2, b2, bt=2, hw_tile=128))
    ref = channel_attention_ref(x, w1, b1, w2, b2)
    assert out.shape == (B, C, 1, 1)
    assert jnp.allclose(out, ref, atol=1e-5, rtol=1e-5)

    print("KERNEL_OK")
</pallas_src>

<mosaic_0001>
module attributes {stable_mosaic.version = 11 : i64} {
  func.func @channel_attention_kernel(%arg0: i32, %arg1: i32, %arg2: memref<2x64x256xf32, #tpu.memory_space<vmem>>, %arg3: memref<64x4xf32, #tpu.memory_space<vmem>>, %arg4: memref<1x4xf32, #tpu.memory_space<vmem>>, %arg5: memref<4x64xf32, #tpu.memory_space<vmem>>, %arg6: memref<1x64xf32, #tpu.memory_space<vmem>>, %arg7: memref<2x1x64xf32, #tpu.memory_space<vmem>>, %arg8: memref<2x64xf32, #tpu.memory_space<vmem>>, %arg9: memref<2x64xf32, #tpu.memory_space<vmem>>) attributes {dimension_semantics = [#tpu.dimension_semantics<parallel>, #tpu.dimension_semantics<arbitrary>], iteration_bounds = array<i64: 1, 1>, scalar_prefetch = 0 : i64, scratch_operands = 2 : i64, tpu.core_type = #tpu.core_type<tc>, window_params = [{transform_indices = @transform_0, window_bounds = array<i64: 2, 64, 256>}, {pipeline_mode = #tpu.pipeline_mode<synchronous>, transform_indices = @transform_1, window_bounds = array<i64: 64, 4>}, {pipeline_mode = #tpu.pipeline_mode<synchronous>, transform_indices = @transform_2, window_bounds = array<i64: 1, 4>}, {pipeline_mode = #tpu.pipeline_mode<synchronous>, transform_indices = @transform_3, window_bounds = array<i64: 4, 64>}, {pipeline_mode = #tpu.pipeline_mode<synchronous>, transform_indices = @transform_4, window_bounds = array<i64: 1, 64>}, {transform_indices = @transform_5, window_bounds = array<i64: 2, 1, 64>}]} {
    %c0_i32 = arith.constant 0 : i32
    %0 = arith.cmpi eq, %arg1, %c0_i32 : i32
    %1 = arith.extui %0 : i1 to i32
    %c0_i32_0 = arith.constant 0 : i32
    %2 = arith.cmpi ne, %1, %c0_i32_0 : i32
    scf.if %2 {
      %cst_14 = arith.constant 0.000000e+00 : f32
      %15 = vector.broadcast %cst_14 : f32 to vector<2x64xf32>
      %c0_15 = arith.constant 0 : index
      %c0_16 = arith.constant 0 : index
      %16 = vector.load %arg8[%c0_15, %c0_16] : memref<2x64xf32, #tpu.memory_space<vmem>>, vector<2x64xf32>
      tpu.vector_store %arg8[%c0_15, %c0_16], %15 {strides = array<i32>} : memref<2x64xf32, #tpu.memory_space<vmem>>, vector<2x64xf32>,
      %cst_17 = arith.constant 0xFF800000 : f32
      %17 = vector.broadcast %cst_17 : f32 to vector<2x64xf32>
      %c0_18 = arith.constant 0 : index
      %c0_19 = arith.constant 0 : index
      %18 = vector.load %arg9[%c0_18, %c0_19] : memref<2x64xf32, #tpu.memory_space<vmem>>, vector<2x64xf32>
      tpu.vector_store %arg9[%c0_18, %c0_19], %17 {strides = array<i32>} : memref<2x64xf32, #tpu.memory_space<vmem>>, vector<2x64xf32>,
    } else {
    }
    %c0 = arith.constant 0 : index
    %c0_1 = arith.constant 0 : index
    %c0_2 = arith.constant 0 : index
    %3 = vector.load %arg2[%c0, %c0_1, %c0_2] : memref<2x64x256xf32, #tpu.memory_space<vmem>>, vector<2x64x256xf32>
    %c0_3 = arith.constant 0 : index
    %c0_4 = arith.constant 0 : index
    %4 = vector.load %arg8[%c0_3, %c0_4] : memref<2x64xf32, #tpu.memory_space<vmem>>, vector<2x64xf32>
    %cst = arith.constant dense<0.000000e+00> : vector<2x64xf32>
    %5 = vector.multi_reduction <add>, %3, %cst [2] : vector<2x64x256xf32> to vector<2x64xf32>
    %6 = arith.addf %4, %5 : vector<2x64xf32>
    %c0_5 = arith.constant 0 : index
    %c0_6 = arith.constant 0 : index
    %7 = vector.load %arg8[%c0_5, %c0_6] : memref<2x64xf32, #tpu.memory_space<vmem>>, vector<2x64xf32>
    tpu.vector_store %arg8[%c0_5, %c0_6], %6 {strides = array<i32>} : memref<2x64xf32, #tpu.memory_space<vmem>>, vector<2x64xf32>,
    %c0_7 = arith.constant 0 : index
    %c0_8 = arith.constant 0 : index
    %8 = vector.load %arg9[%c0_7, %c0_8] : memref<2x64xf32, #tpu.memory_space<vmem>>, vector<2x64xf32>
    %cst_9 = arith.constant dense<0xFF800000> : vector<2x64xf32>
    %9 = vector.multi_reduction <maximumf>, %3, %cst_9 [2] : vector<2x64x256xf32> to vector<2x64xf32>
    %10 = arith.maximumf %8, %9 : vector<2x64xf32>
    %c0_10 = arith.constant 0 : index
    %c0_11 = arith.constant 0 : index
    %11 = vector.load %arg9[%c0_10, %c0_11] : memref<2x64xf32, #tpu.memory_space<vmem>>, vector<2x64xf32>
    tpu.vector_store %arg9[%c0_10, %c0_11], %10 {strides = array<i32>} : memref<2x64xf32, #tpu.memory_space<vmem>>, vector<2x64xf32>,
    %c0_i32_12 = arith.constant 0 : i32
    %12 = arith.cmpi eq, %arg1, %c0_i32_12 : i32
    %13 = arith.extui %12 : i1 to i32
    %c0_i32_13 = arith.constant 0 : i32
    %14 = arith.cmpi ne, %13, %c0_i32_13 : i32
    scf.if %14 {
      %c0_14 = arith.constant 0 : index
      %c0_15 = arith.constant 0 : index
      %15 = vector.load %arg8[%c0_14, %c0_15] : memref<2x64xf32, #tpu.memory_space<vmem>>, vector<2x64xf32>
      %cst_16 = arith.constant 3.906250e-03 : f32
      %16 = vector.broadcast %cst_16 : f32 to vector<2x64xf32>
      %17 = arith.mulf %15, %16 : vector<2x64xf32>
      %c0_17 = arith.constant 0 : index
      %c0_18 = arith.constant 0 : index
      %18 = vector.load %arg9[%c0_17, %c0_18] : memref<2x64xf32, #tpu.memory_space<vmem>>, vector<2x64xf32>
      %19 = tpu.concatenate %17, %18 in 0 : vector<2x64xf32>, vector<2x64xf32> -> vector<4x64xf32>
      %c0_19 = arith.constant 0 : index
      %c0_20 = arith.constant 0 : index
      %20 = vector.load %arg3[%c0_19, %c0_20] : memref<64x4xf32, #tpu.memory_space<vmem>>, vector<64x4xf32>
      %cst_21 = arith.constant dense<0.000000e+00> : vector<4x4xf32>
      %21 = tpu.matmul %19, %20, %cst_21 {dimension_numbers = #tpu.dot_dimension_numbers<[1], [0], [0], [1], [0, 0, 1, 1], [], []>} : vector<4x64xf32>, vector<64x4xf32>, vector<4x4xf32> -> vector<4x4xf32>
      %c0_22 = arith.constant 0 : index
      %c0_23 = arith.constant 0 : index
      %22 = vector.load %arg4[%c0_22, %c0_23] : memref<1x4xf32, #tpu.memory_space<vmem>>, vector<1x4xf32>
      %23 = vector.broadcast %22 : vector<1x4xf32> to vector<4x4xf32>
      %24 = arith.addf %21, %23 : vector<4x4xf32>
      %cst_24 = arith.constant 0.000000e+00 : f32
      %25 = vector.broadcast %cst_24 : f32 to vector<4x4xf32>
      %26 = arith.maximumf %24, %25 : vector<4x4xf32>
      %27 = vector.extract_strided_slice %26 {offsets = [0, 0], sizes = [2, 4], strides = [1, 1]} : vector<4x4xf32> to vector<2x4xf32>
      %28 = vector.extract_strided_slice %26 {offsets = [2, 0], sizes = [2, 4], strides = [1, 1]} : vector<4x4xf32> to vector<2x4xf32>
      %29 = arith.addf %27, %28 : vector<2x4xf32>
      %c0_25 = arith.constant 0 : index
      %c0_26 = arith.constant 0 : index
      %30 = vector.load %arg5[%c0_25, %c0_26] : memref<4x64xf32, #tpu.memory_space<vmem>>, vector<4x64xf32>
      %cst_27 = arith.constant dense<0.000000e+00> : vector<2x64xf32>
      %31 = tpu.matmul %29, %30, %cst_27 {dimension_numbers = #tpu.dot_dimension_numbers<[1], [0], [0], [1], [0, 0, 1, 1], [], []>} : vector<2x4xf32>, vector<4x64xf32>, vector<2x64xf32> -> vector<2x64xf32>
      %c0_28 = arith.constant 0 : index
      %c0_29 = arith.constant 0 : index
      %32 = vector.load %arg6[%c0_28, %c0_29] : memref<1x64xf32, #tpu.memory_space<vmem>>, vector<1x64xf32>
      %cst_30 = arith.constant 2.000000e+00 : f32
      %33 = vector.broadcast %cst_30 : f32 to vector<1x64xf32>
      %34 = arith.mulf %33, %32 : vector<1x64xf32>
      %35 = vector.broadcast %34 : vector<1x64xf32> to vector<2x64xf32>
      %36 = arith.addf %31, %35 : vector<2x64xf32>
      %37 = arith.negf %36 : vector<2x64xf32>
      %38 = math.exp %37 : vector<2x64xf32>
      %cst_31 = arith.constant 1.000000e+00 : f32
      %39 = vector.broadcast %cst_31 : f32 to vector<2x64xf32>
      %40 = arith.addf %39, %38 : vector<2x64xf32>
      %41 = arith.divf %39, %40 : vector<2x64xf32>
      %42 = vector.shape_cast %41 : vector<2x64xf32> to vector<2x1x64xf32>
      %c0_32 = arith.constant 0 : index
      %c0_33 = arith.constant 0 : index
      %c0_34 = arith.constant 0 : index
      %43 = vector.load %arg7[%c0_32, %c0_33, %c0_34] : memref<2x1x64xf32, #tpu.memory_space<vmem>>, vector<2x1x64xf32>
      tpu.vector_store %arg7[%c0_32, %c0_33, %c0_34], %42 {strides = array<i32>} : memref<2x1x64xf32, #tpu.memory_space<vmem>>, vector<2x1x64xf32>,
    } else {
    }
    return
  }
  func.func @transform_0(%arg0: i32, %arg1: i32) -> (i32, i32, i32) {
    %c0_i32 = arith.constant 0 : i32
    %c0_i32_0 = arith.constant 0 : i32
    return %arg0, %c0_i32, %arg1 : i32, i32, i32
  }
  func.func @transform_1(%arg0: i32, %arg1: i32) -> (i32, i32) {
    %c0_i32 = arith.constant 0 : i32
    %c0_i32_0 = arith.constant 0 : i32
    %c0_i32_1 = arith.constant 0 : i32
    return %c0_i32, %c0_i32_0 : i32, i32
  }
  func.func @transform_2(%arg0: i32, %arg1: i32) -> (i32, i32) {
    %c0_i32 = arith.constant 0 : i32
    %c0_i32_0 = arith.constant 0 : i32
    %c0_i32_1 = arith.constant 0 : i32
    return %c0_i32, %c0_i32_0 : i32, i32
  }
  func.func @transform_3(%arg0: i32, %arg1: i32) -> (i32, i32) {
    %c0_i32 = arith.constant 0 : i32
    %c0_i32_0 = arith.constant 0 : i32
    %c0_i32_1 = arith.constant 0 : i32
    return %c0_i32, %c0_i32_0 : i32, i32
  }
  func.func @transform_4(%arg0: i32, %arg1: i32) -> (i32, i32) {
    %c0_i32 = arith.constant 0 : i32
    %c0_i32_0 = arith.constant 0 : i32
    %c0_i32_1 = arith.constant 0 : i32
    return %c0_i32, %c0_i32_0 : i32, i32
  }
  func.func @transform_5(%arg0: i32, %arg1: i32) -> (i32, i32, i32) {
    %c0_i32 = arith.constant 0 : i32
    %c0_i32_0 = arith.constant 0 : i32
    %c0_i32_1 = arith.constant 0 : i32
    return %arg0, %c0_i32, %c0_i32_0 : i32, i32, i32
  }
}

</mosaic_0001>

<llo_original>
// kernel: tpu_custom_call.1
$region0: #{tpu_custom_call.1}
  #allocation0 [shape = 'u32[]', space=smem, size = 0x4, offset = 0x4, fixed_abs, tag = 'smem constant byte address 0x4 - core index']
  #allocation1 [shape = 'u32[72,128]{1,0:T(1,128)}', space=vmem, size = 0x9000, scoped, tag = 'internal scratch']
  #allocation2 [shape = 'f32[2,64]{1,0:T(2,128)}', space=vmem, size = 0x400, scoped, tag = 'scratch operand']
  #allocation3 [shape = 'f32[2,64]{1,0:T(2,128)}', space=vmem, size = 0x400, scoped, tag = 'scratch operand']
  %s0 = inlined_call_operand.hbm [shape: f32[2,64,256], index: 0, kind: input, shape index: {}]
  %s1 = inlined_call_operand.vmem [shape: f32[64,4], index: 1, kind: input, shape index: {}]
  %s2 = inlined_call_operand.vmem [shape: f32[1,4], index: 2, kind: input, shape index: {}]
  %s3 = inlined_call_operand.vmem [shape: f32[4,64], index: 3, kind: input, shape index: {}]
  %s4 = inlined_call_operand.vmem [shape: f32[1,64], index: 4, kind: input, shape index: {}]
  %s5 = inlined_call_operand.hbm [shape: f32[2,1,64], index: 5, kind: output, shape index: {}]
  %s6 = sld [smem:[#allocation0]]
  $region42: #{tpu_custom_call.1} parent=0
    _
  %s8 = ssub.s32 1, %s6
  %s9 = scalar_select 0, %s8, %s6
  $region1: #{tpu_custom_call.1} parent=0
    #allocation4 [shape = 'u8[131072]{0}', space=vmem, size = 0x20000, scoped, tag = 'input window, operand 0, single buffered']
    #allocation5 [shape = 's32[1]{0}', space=sflag, size = 0x4, scoped, tag = 'scoped memory for tpu_custom_call.1']
    #allocation6 [shape = 's32[1]{0}', space=sflag, size = 0x4, scoped, tag = 'scoped memory for tpu_custom_call.1']
    #allocation7 [shape = 'u8[1024]{0}', space=vmem, size = 0x400, scoped, tag = 'output window, operand 0, single buffered']
    %10 = vsyncpa [#allocation5], 0
    %11 = vsyncpa [#allocation6], 0
    // Predicated region
    $region2: #{tpu_custom_call.1} parent=1 // pred_check
      _
    $region3: #{tpu_custom_call.1} parent=1 // pred_check_branch
      %13 = sbr.rel (0) target = $region5
    $region4: #{tpu_custom_call.1} parent=1 // pred_region
      %15 = vsyncadd [#allocation5], 0
      %s16 = sshll.u32 %s0, 4
      %s17 = int_to_ptr.hbm [resolvable:$true] %s16
      %s18 = sshll.u32 [#allocation4], 4
      %s19 = int_to_ptr.vmem [resolvable:$true] %s18
      %24 = dma.hbm_to_vmem [thread:$0]  %s17, 4096, %s19, [#allocation5], 256, 256, 16
    $region5: #{tpu_custom_call.1} parent=1 // pred_fallthru
      _
    // Predicated region
    $region6: #{tpu_custom_call.1} parent=1 // pred_check
      _
    $region7: #{tpu_custom_call.1} parent=1 // pred_check_branch
      %26 = sbr.rel (0) target = $region9
    $region8: #{tpu_custom_call.1} parent=1 // pred_region
      _
    $region9: #{tpu_custom_call.1} parent=1 // pred_fallthru
      _
    // Predicated region
    $region10: #{tpu_custom_call.1} parent=1 // pred_check
      _
    $region11: #{tpu_custom_call.1} parent=1 // pred_check_branch
      %28 = sbr.rel (0) target = $region13
    $region12: #{tpu_custom_call.1} parent=1 // pred_region
      _
    $region13: #{tpu_custom_call.1} parent=1 // pred_fallthru
      _
    // Predicated region
    $region14: #{tpu_custom_call.1} parent=1 // pred_check
      _
    $region15: #{tpu_custom_call.1} parent=1 // pred_check_branch
      %30 = sbr.rel (0) target = $region17
    $region16: #{tpu_custom_call.1} parent=1 // pred_region
      _
    $region17: #{tpu_custom_call.1} parent=1 // pred_fallthru
      _
    // Predicated region
    $region18: #{tpu_custom_call.1} parent=1 // pred_check
      _
    $region19: #{tpu_custom_call.1} parent=1 // pred_check_branch
      %32 = sbr.rel (0) target = $region21
    $region20: #{tpu_custom_call.1} parent=1 // pred_region
      _
    $region21: #{tpu_custom_call.1} parent=1 // pred_fallthru
      _
    // Predicated region
    $region22: #{tpu_custom_call.1} parent=1 // pred_check
      _
    $region23: #{tpu_custom_call.1} parent=1 // pred_check_branch
      %34 = sbr.rel (0) target = $region25
    $region24: #{tpu_custom_call.1} parent=1 // pred_region
      %36 = dma.done [#allocation5], 4096
    $region25: #{tpu_custom_call.1} parent=1 // pred_fallthru
      _
    %p37 = scmp.eq.s32.totalorder 0, 0
    // Predicated region
    $region26: #{tpu_custom_call.1} parent=1 // pred_check
      %p38 = pneg %p37
    $region27: #{tpu_custom_call.1} parent=1 // pred_check_branch
      %40 = sbr.rel (%p38) target = $region29
    $region28: #{tpu_custom_call.1} parent=1 // pred_region
      %vm41 = vcmask 517120
      %42 = vst.msk [vmem:[#allocation2] sm:$0x3] %vm41, 0.0
      %43 = vst.msk [vmem:[#allocation3] sm:$0x3] %vm41, -inf
    $region29: #{tpu_custom_call.1} parent=1 // pred_fallthru
      _
    %v44 = vld [vmem:[#allocation4] sm:$0xff]
    %v45 = vld [vmem:[#allocation4 + $0x8] sm:$0xff]
    %v46 = vld [vmem:[#allocation4 + $0x10] sm:$0xff]
    %v47 = vld [vmem:[#allocation4 + $0x18] sm:$0xff]
    %v48 = vld [vmem:[#allocation4 + $0x20] sm:$0xff]
    %v49 = vld [vmem:[#allocation4 + $0x28] sm:$0xff]
    %v50 = vld [vmem:[#allocation4 + $0x30] sm:$0xff]
    %v51 = vld [vmem:[#allocation4 + $0x38] sm:$0xff]
    %v52 = vld [vmem:[#allocation4 + $0x40] sm:$0xff]
    %v53 = vld [vmem:[#allocation4 + $0x48] sm:$0xff]
    %v54 = vld [vmem:[#allocation4 + $0x50] sm:$0xff]
    %v55 = vld [vmem:[#allocation4 + $0x58] sm:$0xff]
    %v56 = vld [vmem:[#allocation4 + $0x60] sm:$0xff]
    %v57 = vld [vmem:[#allocation4 + $0x68] sm:$0xff]
    %v58 = vld [vmem:[#allocation4 + $0x70] sm:$0xff]
    %v59 = vld [vmem:[#allocation4 + $0x78] sm:$0xff]
    %v60 = vld [vmem:[#allocation4 + $0x80] sm:$0xff]
    %v61 = vld [vmem:[#allocation4 + $0x88] sm:$0xff]
    %v62 = vld [vmem:[#allocation4 + $0x90] sm:$0xff]
    %v63 = vld [vmem:[#allocation4 + $0x98] sm:$0xff]
    %v64 = vld [vmem:[#allocation4 + $0xa0] sm:$0xff]
    %v65 = vld [vmem:[#allocation4 + $0xa8] sm:$0xff]
    %v66 = vld [vmem:[#allocation4 + $0xb0] sm:$0xff]
    %v67 = vld [vmem:[#allocation4 + $0xb8] sm:$0xff]
    %v68 = vld [vmem:[#allocation4 + $0xc0] sm:$0xff]
    %v69 = vld [vmem:[#allocation4 + $0xc8] sm:$0xff]
    %v70 = vld [vmem:[#allocation4 + $0xd0] sm:$0xff]
    %v71 = vld [vmem:[#allocation4 + $0xd8] sm:$0xff]
    %v72 = vld [vmem:[#allocation4 + $0xe0] sm:$0xff]
    %v73 = vld [vmem:[#allocation4 + $0xe8] sm:$0xff]
    %v74 = vld [vmem:[#allocation4 + $0xf0] sm:$0xff]
    %v75 = vld [vmem:[#allocation4 + $0xf8] sm:$0xff]
    %v76 = vld [vmem:[#allocation2] sm:$0x3]
    %v77 = vadd.f32 %v44, %v45
    %78 = vadd.xlane.f32.xlu0 %v77
    %v79 = vpop.xlane.xlu0 %78
    %v80 = vadd.f32 %v46, %v47
    %81 = vadd.xlane.f32.xlu0 %v80
    %v82 = vpop.xlane.xlu0 %81
    %v83 = vadd.f32 %v48, %v49
    %84 = vadd.xlane.f32.xlu0 %v83
    %v85 = vpop.xlane.xlu0 %84
    %v86 = vadd.f32 %v50, %v51
    %87 = vadd.xlane.f32.xlu0 %v86
    %v88 = vpop.xlane.xlu0 %87
    %v89 = vadd.f32 %v52, %v53
    %90 = vadd.xlane.f32.xlu0 %v89
    %v91 = vpop.xlane.xlu0 %90
    %v92 = vadd.f32 %v54, %v55
    %93 = vadd.xlane.f32.xlu0 %v92
    %v94 = vpop.xlane.xlu0 %93
    %v95 = vadd.f32 %v56, %v57
    %96 = vadd.xlane.f32.xlu0 %v95
    %v97 = vpop.xlane.xlu0 %96
    %v98 = vadd.f32 %v58, %v59
    %99 = vadd.xlane.f32.xlu0 %v98
    %v100 = vpop.xlane.xlu0 %99
    %v101 = vadd.f32 %v60, %v61
    %102 = vadd.xlane.f32.xlu0 %v101
    %v103 = vpop.xlane.xlu0 %102
    %v104 = vadd.f32 %v62, %v63
    %105 = vadd.xlane.f32.xlu0 %v104
    %v106 = vpop.xlane.xlu0 %105
    %v107 = vadd.f32 %v64, %v65
    %108 = vadd.xlane.f32.xlu0 %v107
    %v109 = vpop.xlane.xlu0 %108
    %v110 = vadd.f32 %v66, %v67
    %111 = vadd.xlane.f32.xlu0 %v110
    %v112 = vpop.xlane.xlu0 %111
    %v113 = vadd.f32 %v68, %v69
    %114 = vadd.xlane.f32.xlu0 %v113
    %v115 = vpop.xlane.xlu0 %114
    %v116 = vadd.f32 %v70, %v71
    %117 = vadd.xlane.f32.xlu0 %v116
    %v118 = vpop.xlane.xlu0 %117
    %v119 = vadd.f32 %v72, %v73
    %120 = vadd.xlane.f32.xlu0 %v119
    %v121 = vpop.xlane.xlu0 %120
    %v122 = vadd.f32 %v74, %v75
    %123 = vadd.xlane.f32.xlu0 %v122
    %v124 = vpop.xlane.xlu0 %123
    %v141 = vlaneseq
    %v142 = vand.u32 %v141, 127
    %v143 = vperm.slane %v79, %v142
    %v144 = vadd.s32 %v142, 4294967288
    %v145 = vperm.slane %v82, %v144
    %vm146 = vcmask 130112
    %v147 = vsel %vm146, %v145, %v143
    %v148 = vadd.s32 %v142, 4294967280
    %v149 = vperm.slane %v85, %v148
    %vm150 = vcmask 195712
    %v151 = vsel %vm150, %v149, %v147
    %v152 = vadd.s32 %v142, 4294967272
    %v153 = vperm.slane %v88, %v152
    %vm154 = vcmask 261312
    %v155 = vsel %vm154, %v153, %v151
    %v156 = vadd.s32 %v142, 4294967264
    %v157 = vperm.slane %v91, %v156
    %vm158 = vcmask 326912
    %v159 = vsel %vm158, %v157, %v155
    %v160 = vadd.s32 %v142, 4294967256
    %v161 = vperm.slane %v94, %v160
    %vm162 = vcmask 392512
    %v163 = vsel %vm162, %v161, %v159
    %v164 = vadd.s32 %v142, 4294967248
    %v165 = vperm.slane %v97, %v164
    %vm166 = vcmask 458112
    %v167 = vsel %vm166, %v165, %v163
    %v168 = vadd.s32 %v142, 4294967240
    %v169 = vperm.slane %v100, %v168
    %vm170 = vcmask 523712
    %v171 = vsel %vm170, %v169, %v167
    %v172 = vperm.slane %v103, %v142
    %v173 = vperm.slane %v106, %v144
    %v174 = vsel %vm146, %v173, %v172
    %v175 = vperm.slane %v109, %v148
    %v176 = vsel %vm150, %v175, %v174
    %v177 = vperm.slane %v112, %v152
    %v178 = vsel %vm154, %v177, %v176
    %v179 = vperm.slane %v115, %v156
    %v180 = vsel %vm158, %v179, %v178
    %v181 = vperm.slane %v118, %v160
    %v182 = vsel %vm162, %v181, %v180
    %v183 = vperm.slane %v121, %v164
    %v184 = vsel %vm166, %v183, %v182
    %v185 = vperm.slane %v124, %v168
    %v186 = vsel %vm170, %v185, %v184
    %vm187 = vcmask 1041409
    %v188 = vsel %vm187, %v186, %v171
    %v190 = vadd.f32 %v76, %v188
    %vm191 = vcmask 517120
    %192 = vst.msk [vmem:[#allocation2] sm:$0x3] %vm191, %v190
    %v193 = vld [vmem:[#allocation3] sm:$0x3]
    %v194 = vmax.f32 %v44, %v45
    %195 = vmax.xlane.f32.xlu0 %v194
    %v196 = vpop.xlane.xlu0 %195
    %v197 = vmax.f32 %v46, %v47
    %198 = vmax.xlane.f32.xlu0 %v197
    %v199 = vpop.xlane.xlu0 %198
    %v200 = vmax.f32 %v48, %v49
    %201 = vmax.xlane.f32.xlu0 %v200
    %v202 = vpop.xlane.xlu0 %201
    %v203 = vmax.f32 %v50, %v51
    %204 = vmax.xlane.f32.xlu0 %v203
    %v205 = vpop.xlane.xlu0 %204
    %v206 = vmax.f32 %v52, %v53
    %207 = vmax.xlane.f32.xlu0 %v206
    %v208 = vpop.xlane.xlu0 %207
    %v209 = vmax.f32 %v54, %v55
    %210 = vmax.xlane.f32.xlu0 %v209
    %v211 = vpop.xlane.xlu0 %210
    %v212 = vmax.f32 %v56, %v57
    %213 = vmax.xlane.f32.xlu0 %v212
    %v214 = vpop.xlane.xlu0 %213
    %v215 = vmax.f32 %v58, %v59
    %216 = vmax.xlane.f32.xlu0 %v215
    %v217 = vpop.xlane.xlu0 %216
    %v218 = vmax.f32 %v60, %v61
    %219 = vmax.xlane.f32.xlu0 %v218
    %v220 = vpop.xlane.xlu0 %219
    %v221 = vmax.f32 %v62, %v63
    %222 = vmax.xlane.f32.xlu0 %v221
    %v223 = vpop.xlane.xlu0 %222
    %v224 = vmax.f32 %v64, %v65
    %225 = vmax.xlane.f32.xlu0 %v224
    %v226 = vpop.xlane.xlu0 %225
    %v227 = vmax.f32 %v66, %v67
    %228 = vmax.xlane.f32.xlu0 %v227
    %v229 = vpop.xlane.xlu0 %228
    %v230 = vmax.f32 %v68, %v69
    %231 = vmax.xlane.f32.xlu0 %v230
    %v232 = vpop.xlane.xlu0 %231
    %v233 = vmax.f32 %v70, %v71
    %234 = vmax.xlane.f32.xlu0 %v233
    %v235 = vpop.xlane.xlu0 %234
    %v236 = vmax.f32 %v72, %v73
    %237 = vmax.xlane.f32.xlu0 %v236
    %v238 = vpop.xlane.xlu0 %237
    %v239 = vmax.f32 %v74, %v75
    %240 = vmax.xlane.f32.xlu0 %v239
    %v241 = vpop.xlane.xlu0 %240
    %v258 = vperm.slane %v196, %v142
    %v259 = vperm.slane %v199, %v144
    %v260 = vsel %vm146, %v259, %v258
    %v261 = vperm.slane %v202, %v148
    %v262 = vsel %vm150, %v261, %v260
    %v263 = vperm.slane %v205, %v152
    %v264 = vsel %vm154, %v263, %v262
    %v265 = vperm.slane %v208, %v156
    %v266 = vsel %vm158, %v265, %v264
    %v267 = vperm.slane %v211, %v160
    %v268 = vsel %vm162, %v267, %v266
    %v269 = vperm.slane %v214, %v164
    %v270 = vsel %vm166, %v269, %v268
    %v271 = vperm.slane %v217, %v168
    %v272 = vsel %vm170, %v271, %v270
    %v273 = vperm.slane %v220, %v142
    %v274 = vperm.slane %v223, %v144
    %v275 = vsel %vm146, %v274, %v273
    %v276 = vperm.slane %v226, %v148
    %v277 = vsel %vm150, %v276, %v275
    %v278 = vperm.slane %v229, %v152
    %v279 = vsel %vm154, %v278, %v277
    %v280 = vperm.slane %v232, %v156
    %v281 = vsel %vm158, %v280, %v279
    %v282 = vperm.slane %v235, %v160
    %v283 = vsel %vm162, %v282, %v281
    %v284 = vperm.slane %v238, %v164
    %v285 = vsel %vm166, %v284, %v283
    %v286 = vperm.slane %v241, %v168
    %v287 = vsel %vm170, %v286, %v285
    %v288 = vsel %vm187, %v287, %v272
    %v290 = vmax.f32 %v193, %v288
    %291 = vst.msk [vmem:[#allocation3] sm:$0x3] %vm191, %v290
    // Predicated region
    $region30: #{tpu_custom_call.1} parent=1 // pred_check
      %p292 = pneg %p37
    $region31: #{tpu_custom_call.1} parent=1 // pred_check_branch
      %294 = sbr.rel (%p292) target = $region33
    $region32: #{tpu_custom_call.1} parent=1 // pred_region
      %v295 = vld [vmem:[#allocation2] sm:$0x3]
      %v296 = vmul.f32 %v295, 0.00390625
      %v297 = vld [vmem:[#allocation3] sm:$0x3]
      %v299 = vrot.slane %v297, 6
      %vm301 = vcmask 1041408
      %v302 = vsel %vm301, %v296, %v299
      %v303 = vld [vmem:[%s1] sm:$0xff]
      %v304 = vld [vmem:[%s1 + $0x8] sm:$0xff]
      %v305 = vld [vmem:[%s1 + $0x10] sm:$0xff]
      %v306 = vld [vmem:[%s1 + $0x18] sm:$0xff]
      %v307 = vld [vmem:[%s1 + $0x20] sm:$0xff]
      %v308 = vld [vmem:[%s1 + $0x28] sm:$0xff]
      %v309 = vld [vmem:[%s1 + $0x30] sm:$0xff]
      %v310 = vld [vmem:[%s1 + $0x38] sm:$0xff]
      %v311 = vld [vmem:[%s2] sm:$0x1]
      %v313 = vperm.slane %v311, 0
      %vm315 = vcmask 523264
      %v317 = vsel %vm315, %v302, 0
      %319 = vmatpush.msra.mxu0 0.0
      %320 = vmatpush.msra.mxu0 0.0
      %321 = vmatpush.msra.mxu0 0.0
      %322 = vmatpush.msra.mxu0 0.0
      %323 = vmatpush.msra.mxu0 0.0
      %324 = vmatpush.msra.mxu0 0.0
      %325 = vmatpush.msra.mxu0 0.0
      %326 = vmatpush.msra.mxu0 0.0
      %327 = vmatpush.msra.mxu0 %v310
      %328 = vmatpush.msra.mxu0 %v309
      %329 = vmatpush.msra.mxu0 %v308
      %330 = vmatpush.msra.mxu0 %v307
      %331 = vmatpush.msra.mxu0 %v306
      %332 = vmatpush.msra.mxu0 %v305
      %333 = vmatpush.msra.mxu0 %v304
      %334 = vmatpush.msra.mxu0 %v303
      %335 = vmatmul.f32.gmra.mxu0 %v317
      %v336 = vpop.f32.mrf.mxu0
      %v337 = vadd.f32 %v313, %v336
      %338 = vdwg.mxu0
      %v339 = vmax.f32 %v337, 0.0
      %v341 = vrot.slane %v339, 2
      %v343 = vadd.f32 %v339, %v341
      %v344 = vld [vmem:[%s3] sm:$0xf]
      %v345 = vld [vmem:[%s4] sm:$0x1]
      %v346 = vmul.f32 %v345, 2.0
      %v348 = vperm.slane %v346, 0
      %vm350 = vcmask 31744
      %v352 = vsel %vm350, %v343, 0
      %vm354 = vcmask 1043456
      %v356 = vsel %vm354, %v344, 0
      %358 = vmatpush.msra.mxu0 0.0
      %359 = vmatpush.msra.mxu0 0.0
      %360 = vmatpush.msra.mxu0 0.0
      %361 = vmatpush.msra.mxu0 0.0
      %362 = vmatpush.msra.mxu0 0.0
      %363 = vmatpush.msra.mxu0 0.0
      %364 = vmatpush.msra.mxu0 0.0
      %365 = vmatpush.msra.mxu0 0.0
      %366 = vmatpush.msra.mxu0 0.0
      %367 = vmatpush.msra.mxu0 0.0
      %368 = vmatpush.msra.mxu0 0.0
      %369 = vmatpush.msra.mxu0 0.0
      %370 = vmatpush.msra.mxu0 0.0
      %371 = vmatpush.msra.mxu0 0.0
      %372 = vmatpush.msra.mxu0 0.0
      %373 = vmatpush.msra.mxu0 %v356
      %374 = vmatmul.f32.gmra.mxu0 %v352
      %v375 = vpop.f32.mrf.mxu0
      %v376 = vadd.f32 %v348, %v375
      %377 = vdwg.mxu0
      %v378 = vxor.u32 %v376, 2147483648
      %v379 = vmul.f32 %v378, 1.442695
      %v380 = vpow.pop %v379
      %v381 = vadd.f32 %v380, 1.0
      %v382 = vrcp.pop %v381
      %v383 = vmul.f32 %v381, %v382
      %v384 = vsub.f32 1.0, %v383
      %v385 = vmul.f32 %v382, %v384
      %v386 = vadd.f32 %v382, %v385
      %vm387 = vweird.f32 %v381
      %vm388 = vweird.f32 %v382
      %vm389 = vmor %vm387, %vm388
      %v390 = vsel %vm389, %v382, %v386
      %v391 = vand.u32 2147483647, %v381
      %vm392 = vcmp.eq.f32.partialorder %v391, 8.507059e+37
      %v393 = vand.u32 %v381, 2147483648
      %v394 = vor.u32 1.1754944e-38, %v393
      %v395 = vsel %vm392, %v394, %v390
      %v396 = vmul.f32 1.0, %v395
      %v398 = vrot.slane %v396, 1
      %vm400 = vcmask 516096
      %401 = vst.msk [vmem:[#allocation7] sm:$0x1] %vm400, %v396
      %402 = vst.msk [vmem:[#allocation7 + $0x1] sm:$0x1] %vm400, %v398
    $region33: #{tpu_custom_call.1} parent=1 // pred_fallthru
      _
    // Predicated region
    $region34: #{tpu_custom_call.1} parent=1 // pred_check
      _
    $region35: #{tpu_custom_call.1} parent=1 // pred_check_branch
      %404 = sbr.rel (0) target = $region37
    $region36: #{tpu_custom_call.1} parent=1 // pred_region
      %406 = vsyncadd [#allocation6], 0
      %s407 = sshll.u32 [#allocation7], 4
      %s408 = int_to_ptr.vmem [resolvable:$true] %s407
      %s409 = sshll.u32 %s5, 4
      %s410 = int_to_ptr.hbm [resolvable:$true] %s409
      %415 = dma.vmem_to_hbm [thread:$0]  %s408, 32, %s410, [#allocation6], 16, 16, 1
    $region37: #{tpu_custom_call.1} parent=1 // pred_fallthru
      _
    // Predicated region
    $region38: #{tpu_custom_call.1} parent=1 // pred_check
      _
    $region39: #{tpu_custom_call.1} parent=1 // pred_check_branch
      %417 = sbr.rel (0) target = $region41
    $region40: #{tpu_custom_call.1} parent=1 // pred_region
      %419 = dma.done [#allocation6], 32
    $region41: #{tpu_custom_call.1} parent=1 // pred_fallthru
      _
    %420 = vsyncpa [#allocation5], 1
    %421 = vsyncpa [#allocation6], 1

</llo_original>
